<compile_context>
chip_gen: v7x
topology: tpu7x:2x2x1
jax: 0.10.0
libtpu: 0.0.40
codegen_flags: <defaults>
</compile_context>

<pallas_src>
import jax
import jax.numpy as jnp
from jax import lax
from jax.experimental import pallas as pl
from jax.experimental.pallas import tpu as pltpu


def _round_up(x, m):
    return (x + m - 1) // m * m


def _vmem_capacity_bytes():
    # Conservative fallback: assume the smallest current part (v7x, 64 MiB/TC).
    try:
        return int(pltpu.get_tpu_info().vmem_capacity_bytes)
    except Exception:
        return 64 * 1024 * 1024


def _const_spec(block_shape, index_map):
    """BlockSpec for blocks whose block index never changes across the grid.

    Single-buffering them saves one VMEM copy of every weight/bias (matters
    for the large fused head weight); falls back to the default double-buffer
    if this jax build does not expose the pipeline_mode knob.
    """
    try:
        return pl.BlockSpec(block_shape, index_map, pipeline_mode=pl.Buffered(1))
    except (TypeError, AttributeError):
        return pl.BlockSpec(block_shape, index_map)


def _pick_tile_rows(n, nhid2, nhid1, p_per, msz, vmem_cap):
    """Largest 16-aligned row tile whose heads-kernel footprint fits ~55% VMEM."""
    budget = int(vmem_cap * 0.55)
    const_bytes = ((nhid2 * nhid1 + nhid1 * 3 * p_per) * msz
                   + (3 * p_per + 4 * nhid1) * 4)
    per_row = (2 * nhid2 * msz          # emb row tile (double-buffered)
               + 2 * 3 * p_per * 4      # three f32 head-output tiles (double-buffered)
               + 2 * nhid1 * 4          # h / x temporaries
               + 3 * p_per * 4)         # fused head-logits temporary
    tm = (budget - const_bytes) // max(per_row, 1)
    tm = int(max(16, min(1024, tm)))
    tm = (tm // 16) * 16                # 16 rows: f32 (8,128) and bf16 (16,128) safe
    return min(tm, _round_up(n, 16))


def decoder_forward(emb, params, *, tile_rows=None, matmul_dtype=jnp.bfloat16):
    """emb: [N, nhid2] float32. Returns (pi, disp, mean), each [N, nfeat] float32.

    matmul_dtype controls the MXU operand dtype only; statistics, BatchNorm and
    head activations always run in float32 (f32 accumulation on the MXU).
    """
    n, nhid2 = emb.shape
    nhid1 = params["w1"].shape[1]
    nfeat = params["wpi"].shape[1]
    eps = 1e-5

    msz = jnp.dtype(matmul_dtype).itemsize
    p_per = _round_up(nfeat, 128)       # lane-aligned band per head
    p_all = 3 * p_per

    vmem_cap = _vmem_capacity_bytes()
    vmem_limit = max(16 << 20, int(vmem_cap * 0.72))   # <= ~46 MiB on v7x

    if tile_rows is None:
        tm = _pick_tile_rows(n, nhid2, nhid1, p_per, msz, vmem_cap)
    else:
        tm = min(_round_up(tile_rows, 16), _round_up(n, 16))
    # TODO(synk): for extreme nfeat (p_per * tm still over budget at tm=16) add a
    # second "parallel" grid axis tiling the head band dimension.
    n_pad = _round_up(n, tm)
    n_tiles = n_pad // tm

    # ---- host-side (tiny) parameter plumbing --------------------------------
    if n_pad != n:
        emb = jnp.concatenate(
            [emb, jnp.zeros((n_pad - n, nhid2), emb.dtype)], axis=0)
    emb_in = emb.astype(matmul_dtype)
    w1_in = params["w1"].astype(matmul_dtype)
    b1 = params["b1"].astype(jnp.float32)

    # Fused head weight/bias: one 128-aligned band per head (pi | disp | mean).
    wh = jnp.zeros((nhid1, p_all), jnp.float32)
    bh = jnp.zeros((1, p_all), jnp.float32)
    for k, (wk, bk) in enumerate((("wpi", "bpi"), ("wd", "bd"), ("wm", "bm"))):
        wh = wh.at[:, k * p_per:k * p_per + nfeat].set(params[wk])
        bh = bh.at[:, k * p_per:k * p_per + nfeat].set(params[bk])
    wh_in = wh.astype(matmul_dtype)

    # ---- kernel 1: per-tile BatchNorm partial statistics (no h writeback) ---
    def stats_kernel(emb_ref, w1_ref, b1_ref, sum_ref, m2_ref):
        i = pl.program_id(0)
        h = jnp.dot(emb_ref[...], w1_ref[...],
                    preferred_element_type=jnp.float32) + b1_ref[...]
        row = lax.broadcasted_iota(jnp.int32, h.shape, 0) + i * tm
        valid = row < n                                   # mask padded rows
        cnt = jnp.minimum(tm, n - i * tm).astype(jnp.float32)
        s = jnp.sum(jnp.where(valid, h, 0.0), axis=0, keepdims=True)
        dev = jnp.where(valid, h - s / cnt, 0.0)          # centered -> stable var
        m2 = jnp.sum(dev * dev, axis=0, keepdims=True)
        sum_ref[...] = jnp.broadcast_to(s, sum_ref.shape)
        m2_ref[...] = jnp.broadcast_to(m2, m2_ref.shape)

    sum_pad, m2_pad = pl.pallas_call(
        stats_kernel,
        out_shape=(jax.ShapeDtypeStruct((8 * n_tiles, nhid1), jnp.float32),
                   jax.ShapeDtypeStruct((8 * n_tiles, nhid1), jnp.float32)),
        grid_spec=pltpu.PrefetchScalarGridSpec(
            num_scalar_prefetch=0,
            grid=(n_tiles,),
            in_specs=[pl.BlockSpec((tm, nhid2), lambda i: (i, 0)),
                      _const_spec((nhid2, nhid1), lambda i: (0, 0)),
                      _const_spec((1, nhid1), lambda i: (0, 0))],
            out_specs=(pl.BlockSpec((8, nhid1), lambda i: (i, 0)),
                       pl.BlockSpec((8, nhid1), lambda i: (i, 0)))),
        compiler_params=pltpu.CompilerParams(
            # per-tile partial outputs -> row tiles independent -> megacore OK
            dimension_semantics=("parallel",),
            vmem_limit_bytes=vmem_limit),
        cost_estimate=pl.CostEstimate(
            flops=2 * n_pad * nhid2 * nhid1 + 6 * n_pad * nhid1,
            transcendentals=0,
            bytes_accessed=n_pad * nhid2 * msz + nhid2 * nhid1 * msz
            + nhid1 * 4 + 2 * 8 * n_tiles * nhid1 * 4),
    )(emb_in, w1_in, b1)

    # ---- merge partials (Chan) & fold BatchNorm to per-feature scale/shift --
    sums = sum_pad.reshape(n_tiles, 8, nhid1)[:, 0, :]
    m2s = m2_pad.reshape(n_tiles, 8, nhid1)[:, 0, :]
    cnts = jnp.minimum(tm, n - jnp.arange(n_tiles) * tm).astype(jnp.float32)[:, None]
    mu = jnp.sum(sums, axis=0, keepdims=True) / n
    m2_tot = jnp.sum(m2s + cnts * jnp.square(sums / cnts - mu),
                     axis=0, keepdims=True)
    var = m2_tot / n                                       # biased (training-mode BN)
    scale = params["gamma"].astype(jnp.float32) * lax.rsqrt(var + eps)
    shift = params["beta"].astype(jnp.float32) - mu * scale

    # ---- kernel 2: recompute h, BN+ReLU, fused band matmul, per-band heads --
    def heads_kernel(emb_ref, w1_ref, b1_ref, scale_ref, shift_ref,
                     wh_ref, bh_ref, pi_ref, disp_ref, mean_ref):
        # Recompute h from the emb tile: cheaper than an HBM h round trip.
        h = jnp.dot(emb_ref[...], w1_ref[...],
                    preferred_element_type=jnp.float32) + b1_ref[...]
        x = jnp.maximum(h * scale_ref[...] + shift_ref[...], 0.0)
        lin = jnp.dot(x.astype(matmul_dtype), wh_ref[...],
                      preferred_element_type=jnp.float32) + bh_ref[...]
        # Per-band activations on lane-aligned static slices (no iota/select).
        pi_ref[...] = jax.nn.sigmoid(lin[:, :p_per])
        disp_ref[...] = jnp.clip(jax.nn.softplus(lin[:, p_per:2 * p_per]),
                                 1e-4, 1e4)
        mean_ref[...] = jnp.clip(jnp.exp(lin[:, 2 * p_per:]), 1e-5, 1e6)

    out_sds = jax.ShapeDtypeStruct((n_pad, p_per), jnp.float32)
    pi_pad, disp_pad, mean_pad = pl.pallas_call(
        heads_kernel,
        out_shape=(out_sds, out_sds, out_sds),
        grid_spec=pltpu.PrefetchScalarGridSpec(
            num_scalar_prefetch=0,
            grid=(n_tiles,),
            in_specs=[pl.BlockSpec((tm, nhid2), lambda i: (i, 0)),
                      _const_spec((nhid2, nhid1), lambda i: (0, 0)),
                      _const_spec((1, nhid1), lambda i: (0, 0)),
                      _const_spec((1, nhid1), lambda i: (0, 0)),
                      _const_spec((1, nhid1), lambda i: (0, 0)),
                      _const_spec((nhid1, p_all), lambda i: (0, 0)),
                      _const_spec((1, p_all), lambda i: (0, 0))],
            out_specs=(pl.BlockSpec((tm, p_per), lambda i: (i, 0)),
                       pl.BlockSpec((tm, p_per), lambda i: (i, 0)),
                       pl.BlockSpec((tm, p_per), lambda i: (i, 0)))),
        compiler_params=pltpu.CompilerParams(
            dimension_semantics=("parallel",),   # megacore sharding on v7x
            vmem_limit_bytes=vmem_limit),
        cost_estimate=pl.CostEstimate(
            flops=2 * n_pad * nhid1 * p_all + 2 * n_pad * nhid2 * nhid1
            + 10 * n_pad * p_per + 4 * n_pad * nhid1,
            transcendentals=5 * n_pad * p_per,
            bytes_accessed=n_pad * nhid2 * msz
            + (nhid2 * nhid1 + nhid1 * p_all) * msz
            + (3 * p_all + 4 * nhid1) * 4 + 3 * n_pad * p_per * 4),
    )(emb_in, w1_in, b1, scale, shift, wh_in, bh)

    # Lane-aligned prefix slices (fuse into consumers; no full-slab re-slicing).
    pi = pi_pad[:n, :nfeat]
    disp = disp_pad[:n, :nfeat]
    mean = mean_pad[:n, :nfeat]
    return pi, disp, mean


def make_params(key, nfeat, nhid1, nhid2):
    """Deterministic synthetic params mimicking the PyTorch module's shapes.

    Linear weights stored as [in, out] (transpose of PyTorch's [out, in]),
    BatchNorm gamma/beta as [1, nhid1] row vectors.
    """
    ks = jax.random.split(key, 8)

    def u(k, shape, scale):
        return jax.random.uniform(k, shape, jnp.float32, -scale, scale)

    s1 = 1.0 / jnp.sqrt(nhid2)
    s2 = 1.0 / jnp.sqrt(nhid1)
    return {
        "w1":    u(ks[0], (nhid2, nhid1), s1),
        "b1":    u(ks[1], (1, nhid1), s1),
        "gamma": jnp.ones((1, nhid1), jnp.float32),
        "beta":  jnp.zeros((1, nhid1), jnp.float32),
        "wpi":   u(ks[2], (nhid1, nfeat), s2),
        "bpi":   u(ks[3], (1, nfeat), s2),
        "wd":    u(ks[4], (nhid1, nfeat), s2),
        "bd":    u(ks[5], (1, nfeat), s2),
        "wm":    u(ks[6], (nhid1, nfeat), s2),
        "bm":    u(ks[7], (1, nfeat), s2),
    }


def decoder_reference(emb, p):
    """Pure-JAX reference (matches PyTorch forward in training mode)."""
    eps = 1e-5
    h = emb @ p["w1"] + p["b1"]
    mu = jnp.mean(h, axis=0, keepdims=True)
    var = jnp.mean((h - mu) ** 2, axis=0, keepdims=True)
    x = jnp.maximum((h - mu) / jnp.sqrt(var + eps) * p["gamma"] + p["beta"], 0.0)
    pi = jax.nn.sigmoid(x @ p["wpi"] + p["bpi"])
    disp = jnp.clip(jax.nn.softplus(x @ p["wd"] + p["bd"]), 1e-4, 1e4)
    mean = jnp.clip(jnp.exp(x @ p["wm"] + p["bm"]), 1e-5, 1e6)
    return pi, disp, mean


if __name__ == "__main__":
    nfeat, nhid1, nhid2 = 16, 64, 32
    batch = 10   # deliberately not tile-aligned -> exercises row masking path

    key = jax.random.PRNGKey(0)
    k_emb, k_par = jax.random.split(key)
    emb = jax.random.normal(k_emb, (batch, nhid2), jnp.float32)
    params = make_params(k_par, nfeat, nhid1, nhid2)

    pi_r, disp_r, mean_r = decoder_reference(emb, params)

    # f32 MXU path (faithful to the PyTorch module numerics).
    pi, disp, mean = jax.block_until_ready(
        decoder_forward(emb, params, matmul_dtype=jnp.float32))
    assert pi.shape == (batch, nfeat)
    assert disp.shape == (batch, nfeat)
    assert mean.shape == (batch, nfeat)
    assert jnp.allclose(pi, pi_r, atol=1e-4, rtol=1e-4)
    assert jnp.allclose(disp, disp_r, atol=1e-4, rtol=1e-4)
    assert jnp.allclose(mean, mean_r, atol=1e-4, rtol=1e-4)

    # Default bf16-operand MXU path (v6e/v7x throughput); loose numeric check.
    pi_b, disp_b, mean_b = jax.block_until_ready(decoder_forward(emb, params))
    assert jnp.allclose(pi_b, pi_r, atol=1e-1, rtol=1e-1)
    assert jnp.allclose(disp_b, disp_r, atol=1e-1, rtol=1e-1)
    assert jnp.allclose(mean_b, mean_r, atol=1e-1, rtol=1e-1)

    print("KERNEL_OK")
</pallas_src>

<mosaic_0001>
module attributes {stable_mosaic.version = 11 : i64} {
  func.func @stats_kernel(%arg0: i32, %arg1: memref<16x32xf32, #tpu.memory_space<vmem>>, %arg2: memref<32x64xf32, #tpu.memory_space<vmem>>, %arg3: memref<1x64xf32, #tpu.memory_space<vmem>>, %arg4: memref<8x64xf32, #tpu.memory_space<vmem>>, %arg5: memref<8x64xf32, #tpu.memory_space<vmem>>) attributes {dimension_semantics = [#tpu.dimension_semantics<parallel>], iteration_bounds = array<i64: 1>, scalar_prefetch = 0 : i64, scratch_operands = 0 : i64, tpu.core_type = #tpu.core_type<tc>, window_params = [{transform_indices = @transform_0, window_bounds = array<i64: 16, 32>}, {pipeline_mode = #tpu.pipeline_mode<synchronous>, transform_indices = @transform_1, window_bounds = array<i64: 32, 64>}, {pipeline_mode = #tpu.pipeline_mode<synchronous>, transform_indices = @transform_2, window_bounds = array<i64: 1, 64>}, {transform_indices = @transform_3, window_bounds = array<i64: 8, 64>}, {transform_indices = @transform_4, window_bounds = array<i64: 8, 64>}]} {
    %c0 = arith.constant 0 : index
    %c0_0 = arith.constant 0 : index
    %0 = vector.load %arg1[%c0, %c0_0] : memref<16x32xf32, #tpu.memory_space<vmem>>, vector<16x32xf32>
    %c0_1 = arith.constant 0 : index
    %c0_2 = arith.constant 0 : index
    %1 = vector.load %arg2[%c0_1, %c0_2] : memref<32x64xf32, #tpu.memory_space<vmem>>, vector<32x64xf32>
    %cst = arith.constant dense<0.000000e+00> : vector<16x64xf32>
    %2 = tpu.matmul %0, %1, %cst {dimension_numbers = #tpu.dot_dimension_numbers<[1], [0], [0], [1], [0, 0, 1, 1], [], []>} : vector<16x32xf32>, vector<32x64xf32>, vector<16x64xf32> -> vector<16x64xf32>
    %c0_3 = arith.constant 0 : index
    %c0_4 = arith.constant 0 : index
    %3 = vector.load %arg3[%c0_3, %c0_4] : memref<1x64xf32, #tpu.memory_space<vmem>>, vector<1x64xf32>
    %4 = vector.broadcast %3 : vector<1x64xf32> to vector<16x64xf32>
    %5 = arith.addf %2, %4 : vector<16x64xf32>
    %6 = tpu.iota {dimensions = array<i32: 0>} : vector<16x64xi32>
    %c16_i32 = arith.constant 16 : i32
    %7 = arith.muli %arg0, %c16_i32 : i32
    %8 = vector.broadcast %7 : i32 to vector<16x64xi32>
    %9 = arith.addi %6, %8 : vector<16x64xi32>
    %c10_i32 = arith.constant 10 : i32
    %10 = vector.broadcast %c10_i32 : i32 to vector<16x64xi32>
    %11 = arith.cmpi slt, %9, %10 : vector<16x64xi32>
    %c16_i32_5 = arith.constant 16 : i32
    %12 = arith.muli %arg0, %c16_i32_5 : i32
    %c10_i32_6 = arith.constant 10 : i32
    %13 = arith.subi %c10_i32_6, %12 : i32
    %c16_i32_7 = arith.constant 16 : i32
    %14 = arith.minsi %c16_i32_7, %13 : i32
    %15 = arith.sitofp %14 : i32 to f32
    %cst_8 = arith.constant 0.000000e+00 : f32
    %16 = vector.broadcast %cst_8 : f32 to vector<16x64xf32>
    %17 = arith.select %11, %5, %16 : vector<16x64xi1>, vector<16x64xf32>
    %cst_9 = arith.constant dense<0.000000e+00> : vector<64xf32>
    %18 = vector.multi_reduction <add>, %17, %cst_9 [0] : vector<16x64xf32> to vector<64xf32>
    %19 = vector.shape_cast %18 : vector<64xf32> to vector<1x64xf32>
    %20 = vector.broadcast %15 : f32 to vector<1x64xf32>
    %21 = arith.divf %19, %20 : vector<1x64xf32>
    %22 = vector.broadcast %21 : vector<1x64xf32> to vector<16x64xf32>
    %23 = arith.subf %5, %22 : vector<16x64xf32>
    %cst_10 = arith.constant 0.000000e+00 : f32
    %24 = vector.broadcast %cst_10 : f32 to vector<16x64xf32>
    %25 = arith.select %11, %23, %24 : vector<16x64xi1>, vector<16x64xf32>
    %26 = arith.mulf %25, %25 : vector<16x64xf32>
    %cst_11 = arith.constant dense<0.000000e+00> : vector<64xf32>
    %27 = vector.multi_reduction <add>, %26, %cst_11 [0] : vector<16x64xf32> to vector<64xf32>
    %28 = vector.shape_cast %27 : vector<64xf32> to vector<1x64xf32>
    %29 = vector.shape_cast %19 : vector<1x64xf32> to vector<1x64xf32>
    %30 = vector.broadcast %29 : vector<1x64xf32> to vector<8x64xf32>
    %c0_12 = arith.constant 0 : index
    %c0_13 = arith.constant 0 : index
    %31 = vector.load %arg4[%c0_12, %c0_13] : memref<8x64xf32, #tpu.memory_space<vmem>>, vector<8x64xf32>
    tpu.vector_store %arg4[%c0_12, %c0_13], %30 {strides = array<i32>} : memref<8x64xf32, #tpu.memory_space<vmem>>, vector<8x64xf32>,
    %32 = vector.shape_cast %28 : vector<1x64xf32> to vector<1x64xf32>
    %33 = vector.broadcast %32 : vector<1x64xf32> to vector<8x64xf32>
    %c0_14 = arith.constant 0 : index
    %c0_15 = arith.constant 0 : index
    %34 = vector.load %arg5[%c0_14, %c0_15] : memref<8x64xf32, #tpu.memory_space<vmem>>, vector<8x64xf32>
    tpu.vector_store %arg5[%c0_14, %c0_15], %33 {strides = array<i32>} : memref<8x64xf32, #tpu.memory_space<vmem>>, vector<8x64xf32>,
    return
  }
  func.func @transform_0(%arg0: i32) -> (i32, i32) {
    %c0_i32 = arith.constant 0 : i32
    %c0_i32_0 = arith.constant 0 : i32
    return %arg0, %c0_i32 : i32, i32
  }
  func.func @transform_1(%arg0: i32) -> (i32, i32) {
    %c0_i32 = arith.constant 0 : i32
    %c0_i32_0 = arith.constant 0 : i32
    %c0_i32_1 = arith.constant 0 : i32
    return %c0_i32, %c0_i32_0 : i32, i32
  }
  func.func @transform_2(%arg0: i32) -> (i32, i32) {
    %c0_i32 = arith.constant 0 : i32
    %c0_i32_0 = arith.constant 0 : i32
    %c0_i32_1 = arith.constant 0 : i32
    return %c0_i32, %c0_i32_0 : i32, i32
  }
  func.func @transform_3(%arg0: i32) -> (i32, i32) {
    %c0_i32 = arith.constant 0 : i32
    %c0_i32_0 = arith.constant 0 : i32
    return %arg0, %c0_i32 : i32, i32
  }
  func.func @transform_4(%arg0: i32) -> (i32, i32) {
    %c0_i32 = arith.constant 0 : i32
    %c0_i32_0 = arith.constant 0 : i32
    return %arg0, %c0_i32 : i32, i32
  }
}

</mosaic_0001>

<llo_original>
// kernel: tpu_custom_call.1
$region0: #{tpu_custom_call.1}
  #allocation0 [shape = 'u32[]', space=smem, size = 0x4, offset = 0x4, fixed_abs, tag = 'smem constant byte address 0x4 - core index']
  #allocation1 [shape = 'u32[144,128]{1,0:T(1,128)}', space=vmem, size = 0x12000, scoped, tag = 'internal scratch']
  %s0 = inlined_call_operand.hbm [shape: f32[16,32], index: 0, kind: input, shape index: {}]
  %s1 = inlined_call_operand.hbm [shape: f32[32,64], index: 1, kind: input, shape index: {}]
  %s2 = inlined_call_operand.vmem [shape: f32[1,64], index: 2, kind: input, shape index: {}]
  %s3 = inlined_call_operand.hbm [shape: f32[8,64], index: 3, kind: output, shape index: {0}]
  %s4 = inlined_call_operand.hbm [shape: f32[8,64], index: 4, kind: output, shape index: {1}]
  %5 = xla_tuple %s3, %s4
  %s6 = sld [smem:[#allocation0]]
  $region38: #{tpu_custom_call.1} parent=0
    _
  %s8 = ssub.s32 1, %s6
  %s9 = scalar_select 0, %s8, %s6
  $region1: #{tpu_custom_call.1} parent=0
    #allocation2 [shape = 'u8[8192]{0}', space=vmem, size = 0x2000, scoped, tag = 'input window, operand 0, single buffered']
    #allocation3 [shape = 's32[1]{0}', space=sflag, size = 0x4, scoped, tag = 'scoped memory for tpu_custom_call.1']
    #allocation4 [shape = 's32[1]{0}', space=sflag, size = 0x4, scoped, tag = 'scoped memory for tpu_custom_call.1']
    #allocation5 [shape = 'u8[16384]{0}', space=vmem, size = 0x4000, scoped, tag = 'input window, operand 1, single buffered']
    #allocation6 [shape = 's32[1]{0}', space=sflag, size = 0x4, scoped, tag = 'scoped memory for tpu_custom_call.1']
    #allocation7 [shape = 'u8[4096]{0}', space=vmem, size = 0x1000, scoped, tag = 'output window, operand 0, single buffered']
    #allocation8 [shape = 'u8[4096]{0}', space=vmem, size = 0x1000, scoped, tag = 'output window, operand 1, single buffered']
    #allocation9 [shape = 's32[1]{0}', space=sflag, size = 0x4, scoped, tag = 'scoped memory for tpu_custom_call.1']
    %10 = vsyncpa [#allocation3], 0
    %11 = vsyncpa [#allocation6], 0
    %12 = vsyncpa [#allocation4], 0
    %13 = vsyncpa [#allocation9], 0
    // Predicated region
    $region2: #{tpu_custom_call.1} parent=1 // pred_check
      _
    $region3: #{tpu_custom_call.1} parent=1 // pred_check_branch
      %15 = sbr.rel (0) target = $region5
    $region4: #{tpu_custom_call.1} parent=1 // pred_region
      %s17 = ssub.s32 256, 256
      %18 = vsyncadd [#allocation3], %s17
      %s19 = sshll.u32 [#allocation2], 4
      %s20 = int_to_ptr.vmem [resolvable:$true] %s19
      %25 = dma.hbm_to_vmem [thread:$0]  %s0, 256, %s20, [#allocation3], 128, 128, 8
    $region5: #{tpu_custom_call.1} parent=1 // pred_fallthru
      _
    // Predicated region
    $region6: #{tpu_custom_call.1} parent=1 // pred_check
      _
    $region7: #{tpu_custom_call.1} parent=1 // pred_check_branch
      %27 = sbr.rel (0) target = $region9
    $region8: #{tpu_custom_call.1} parent=1 // pred_region
      %s29 = ssub.s32 512, 512
      %30 = vsyncadd [#allocation6], %s29
      %s31 = sshll.u32 [#allocation5], 4
      %s32 = int_to_ptr.vmem [resolvable:$true] %s31
      %37 = dma.hbm_to_vmem [thread:$0]  %s1, 512, %s32, [#allocation6], 128, 128, 8
    $region9: #{tpu_custom_call.1} parent=1 // pred_fallthru
      _
    // Predicated region
    $region10: #{tpu_custom_call.1} parent=1 // pred_check
      _
    $region11: #{tpu_custom_call.1} parent=1 // pred_check_branch
      %39 = sbr.rel (0) target = $region13
    $region12: #{tpu_custom_call.1} parent=1 // pred_region
      _
    $region13: #{tpu_custom_call.1} parent=1 // pred_fallthru
      _
    // Predicated region
    $region14: #{tpu_custom_call.1} parent=1 // pred_check
      _
    $region15: #{tpu_custom_call.1} parent=1 // pred_check_branch
      %41 = sbr.rel (0) target = $region17
    $region16: #{tpu_custom_call.1} parent=1 // pred_region
      %42 = dma.done [#allocation3], 256
    $region17: #{tpu_custom_call.1} parent=1 // pred_fallthru
      _
    // Predicated region
    $region18: #{tpu_custom_call.1} parent=1 // pred_check
      _
    $region19: #{tpu_custom_call.1} parent=1 // pred_check_branch
      %44 = sbr.rel (0) target = $region21
    $region20: #{tpu_custom_call.1} parent=1 // pred_region
      %45 = dma.done [#allocation6], 512
    $region21: #{tpu_custom_call.1} parent=1 // pred_fallthru
      _
    %v46 = vld [vmem:[#allocation2] sm:$0xff]
    %v47 = vld [vmem:[#allocation2 + $0x8] sm:$0xff]
    %v48 = vld [vmem:[#allocation5] sm:$0xff]
    %v49 = vld [vmem:[#allocation5 + $0x8] sm:$0xff]
    %v50 = vld [vmem:[#allocation5 + $0x10] sm:$0xff]
    %v51 = vld [vmem:[#allocation5 + $0x18] sm:$0xff]
    %v52 = vld [vmem:[%s2] sm:$0x1]
    %v54 = vlaneseq
    %v55 = vshrl.u32 %v54, 7
    %v56 = vsub.s32 0, %v55
    %v57 = vrot.slane %v52, %v56
    %vm59 = vcmask 261120
    %v61 = vsel %vm59, %v46, 0
    %v64 = vsel %vm59, %v47, 0
    %66 = vmatprep.subr.mxu0 0.0
    %67 = vmatpush1.msra.mxu0 %v48
    %68 = vmatprep.subr.mxu0 0.0
    %69 = vmatpush1.msra.mxu0 %v49
    %70 = vmatprep.subr.mxu0 0.0
    %71 = vmatpush1.msra.mxu0 %v50
    %72 = vmatprep.subr.mxu0 0.0
    %73 = vmatpush1.msra.mxu0 %v51
    %74 = vmatprep.subr.mxu0 0.0
    %75 = vmatpush1.msra.mxu0 0.0
    %76 = vmatprep.subr.mxu0 0.0
    %77 = vmatpush1.msra.mxu0 0.0
    %78 = vmatprep.subr.mxu0 0.0
    %79 = vmatpush1.msra.mxu0 0.0
    %80 = vmatprep.subr.mxu0 0.0
    %81 = vmatpush1.msra.mxu0 0.0
    %82 = vmatprep.subr.mxu0 0.0
    %83 = vmatpush1.msra.mxu0 0.0
    %84 = vmatprep.subr.mxu0 0.0
    %85 = vmatpush1.msra.mxu0 0.0
    %86 = vmatprep.subr.mxu0 0.0
    %87 = vmatpush1.msra.mxu0 0.0
    %88 = vmatprep.subr.mxu0 0.0
    %89 = vmatpush1.msra.mxu0 0.0
    %90 = vmatprep.subr.mxu0 0.0
    %91 = vmatpush1.msra.mxu0 0.0
    %92 = vmatprep.subr.mxu0 0.0
    %93 = vmatpush1.msra.mxu0 0.0
    %94 = vmatprep.subr.mxu0 0.0
    %95 = vmatpush1.msra.mxu0 0.0
    %96 = vmatprep.subr.mxu0 0.0
    %97 = vmatpush1.msra.mxu0 0.0
    %98 = vmatprep.subr.mxu0 0.0
    %99 = vmatpush1.msra.mxu0 0.0
    %100 = vmatprep.subr.mxu0 0.0
    %101 = vmatpush1.msra.mxu0 0.0
    %102 = vmatprep.subr.mxu0 0.0
    %103 = vmatpush1.msra.mxu0 0.0
    %104 = vmatprep.subr.mxu0 0.0
    %105 = vmatpush1.msra.mxu0 0.0
    %106 = vmatprep.subr.mxu0 0.0
    %107 = vmatpush1.msra.mxu0 0.0
    %108 = vmatprep.subr.mxu0 0.0
    %109 = vmatpush1.msra.mxu0 0.0
    %110 = vmatprep.subr.mxu0 0.0
    %111 = vmatpush1.msra.mxu0 0.0
    %112 = vmatprep.subr.mxu0 0.0
    %113 = vmatpush1.msra.mxu0 0.0
    %114 = vmatprep.subr.mxu0 0.0
    %115 = vmatpush1.msra.mxu0 0.0
    %116 = vmatprep.subr.mxu0 0.0
    %117 = vmatpush1.msra.mxu0 0.0
    %118 = vmatprep.subr.mxu0 0.0
    %119 = vmatpush1.msra.mxu0 0.0
    %120 = vmatprep.subr.mxu0 0.0
    %121 = vmatpush1.msra.mxu0 0.0
    %122 = vmatprep.subr.mxu0 0.0
    %123 = vmatpush1.msra.mxu0 0.0
    %124 = vmatprep.subr.mxu0 0.0
    %125 = vmatpush1.msra.mxu0 0.0
    %126 = vmatprep.subr.mxu0 0.0
    %127 = vmatpush1.msra.mxu0 0.0
    %128 = vmatprep.subr.mxu0 0.0
    %129 = vmatpush1.msra.mxu0 0.0
    %130 = vmatprep.mubr.f32.mxu0 0.0
    %131 = vmatmul.mubr.f32.gmra.mrb[0].mxu0 %v61
    %v132 = vpop.f32.mrb[0].mxu0
    %v133 = vadd.f32 %v57, %v132
    %v134 = vpop.f32.mrb[0].mxu0
    %135 = vmatprep.mubr.f32.mxu0 0.0
    %136 = vmatmul.mubr.f32.gmra.mrb[0].mxu0 %v64
    %v137 = vpop.f32.mrb[0].mxu0
    %v138 = vadd.f32 %v57, %v137
    %v139 = vpop.f32.mrb[0].mxu0
    %140 = vdwg.mxu0
    %v141 = vlaneseq
    %v142 = vshrl.u32 %v141, 7
    %v143 = vadd.s32 %v142, 8
    %s144 = smul.u32 0, 16
    %v145 = vstv %s144
    %v146 = vadd.s32 %v142, %v145
    %v147 = vadd.s32 %v143, %v145
    %vm148 = vcmp.lt.s32.totalorder %v146, 10
    %vm149 = vcmp.lt.s32.totalorder %v147, 10
    %s150 = ssub.s32 10, %s144
    %p151 = scmp.lt.s32.totalorder %s150, 16
    %s152 = scalar_select %p151, %s150, 16
    %s153 = scvt.s32.f32 %s152
    %v154 = vsel %vm148, %v133, 0.0
    %v155 = vsel %vm149, %v138, 0.0
    %vm156 = vcmask 523264
    %v157 = vsel %vm156, %v154, 0.0
    %v158 = vsel %vm156, %v155, 0.0
    %v159 = vadd.f32 %v157, %v158
    %v160 = vrot.slane %v159, 4
    %v161 = vadd.f32 %v159, %v160
    %v162 = vrot.slane %v161, 2
    %v163 = vadd.f32 %v161, %v162
    %v164 = vrot.slane %v163, 1
    %v165 = vadd.f32 %v163, %v164
    %v166 = vstv %s153
    %v167 = vrcp.pop %v166
    %v168 = vmul.f32 %v165, %v167
    %v169 = vsub.f32 %v133, %v168
    %v170 = vsub.f32 %v138, %v168
    %v171 = vsel %vm148, %v169, 0.0
    %v172 = vsel %vm149, %v170, 0.0
    %v173 = vmul.f32 %v171, %v171
    %v174 = vmul.f32 %v172, %v172
    %v175 = vsel %vm156, %v173, 0.0
    %v176 = vsel %vm156, %v174, 0.0
    %v177 = vadd.f32 %v175, %v176
    %v178 = vrot.slane %v177, 4
    %v179 = vadd.f32 %v177, %v178
    %v180 = vrot.slane %v179, 2
    %v181 = vadd.f32 %v179, %v180
    %v182 = vrot.slane %v181, 1
    %v183 = vadd.f32 %v181, %v182
    %184 = vst.msk [vmem:[#allocation7] sm:$0xff] %vm156, %v165
    %185 = vst.msk [vmem:[#allocation8] sm:$0xff] %vm156, %v183
    // Predicated region
    $region22: #{tpu_custom_call.1} parent=1 // pred_check
      _
    $region23: #{tpu_custom_call.1} parent=1 // pred_check_branch
      %187 = sbr.rel (0) target = $region25
    $region24: #{tpu_custom_call.1} parent=1 // pred_region
      %s189 = ssub.s32 128, 128
      %190 = vsyncadd [#allocation4], %s189
      %s192 = sshll.u32 [#allocation7], 4
      %s193 = int_to_ptr.vmem [resolvable:$true] %s192
      %195 = dma.vmem_to_hbm [thread:$0]  %s193, 128, %s3, [#allocation4]
    $region25: #{tpu_custom_call.1} parent=1 // pred_fallthru
      _
    // Predicated region
    $region26: #{tpu_custom_call.1} parent=1 // pred_check
      _
    $region27: #{tpu_custom_call.1} parent=1 // pred_check_branch
      %197 = sbr.rel (0) target = $region29
    $region28: #{tpu_custom_call.1} parent=1 // pred_region
      %s199 = ssub.s32 128, 128
      %200 = vsyncadd [#allocation9], %s199
      %s202 = sshll.u32 [#allocation8], 4
      %s203 = int_to_ptr.vmem [resolvable:$true] %s202
      %205 = dma.vmem_to_hbm [thread:$0]  %s203, 128, %s4, [#allocation9]
    $region29: #{tpu_custom_call.1} parent=1 // pred_fallthru
      _
    // Predicated region
    $region30: #{tpu_custom_call.1} parent=1 // pred_check
      _
    $region31: #{tpu_custom_call.1} parent=1 // pred_check_branch
      %207 = sbr.rel (0) target = $region33
    $region32: #{tpu_custom_call.1} parent=1 // pred_region
      %208 = dma.done [#allocation4], 128
    $region33: #{tpu_custom_call.1} parent=1 // pred_fallthru
      _
    // Predicated region
    $region34: #{tpu_custom_call.1} parent=1 // pred_check
      _
    $region35: #{tpu_custom_call.1} parent=1 // pred_check_branch
      %210 = sbr.rel (0) target = $region37
    $region36: #{tpu_custom_call.1} parent=1 // pred_region
      %211 = dma.done [#allocation9], 128
    $region37: #{tpu_custom_call.1} parent=1 // pred_fallthru
      _
    %212 = vsyncpa [#allocation3], 1
    %213 = vsyncpa [#allocation6], 1
    %214 = vsyncpa [#allocation4], 1
    %215 = vsyncpa [#allocation9], 1

</llo_original>
